<compile_context>
chip_gen: v5e
topology: v5e:2x2
jax: 0.10.0
libtpu: 0.0.40
codegen_flags: <defaults>
</compile_context>

<pallas_src>
import jax
import jax.numpy as jnp
from jax.experimental import pallas as pl
from jax.experimental.pallas import tpu as pltpu

_LANE = 128


def _round_up(n, m):
    return ((n + m - 1) // m) * m


def _mlp_kernel(x_ref, *refs):
    """refs = (w0, b0, w1, b1, ..., wL, bL, out_ref).

    Hidden layers: ReLU(x @ W + b); final layer: tanh(x @ W + b).
    Hidden feature dims are lane-padded (zeros), streamed dims are natural width.
    """
    out_ref = refs[-1]
    param_refs = refs[:-1]
    n_layers = len(param_refs) // 2

    h = x_ref[...]
    for li in range(n_layers):
        w = param_refs[2 * li][...]
        b = param_refs[2 * li + 1][...]          # (1, out), broadcasts over rows
        z = jnp.dot(h, w, preferred_element_type=jnp.float32) + b
        if li < n_layers - 1:
            h = jnp.maximum(z, 0.0)              # ReLU on hidden layers (VPU)
        else:
            h = jnp.tanh(z)                      # tanh on output layer (EUP)
    out_ref[...] = h.astype(out_ref.dtype)


def _pad_hidden_dims(params):
    """Zero-pad only the *hidden* feature dims to 128 lanes.

    First layer keeps K = state_size (matches the unpadded x stream);
    last layer keeps N = action_size (matches the unpadded output block).
    """
    n = len(params)
    padded = []
    prev_out = params[0][0].shape[0]             # = state_size, unpadded
    for li, (w, b) in enumerate(params):
        fi, fo = w.shape
        fo_p = fo if li == n - 1 else _round_up(fo, _LANE)
        w_p = jnp.pad(w.astype(jnp.float32), ((0, prev_out - fi), (0, fo_p - fo)))
        b_p = jnp.pad(jnp.reshape(b, (1, -1)).astype(jnp.float32),
                      ((0, 0), (0, fo_p - fo)))
        padded.append((w_p, b_p))
        prev_out = fo_p
    return padded


def fully_connected_policy(x, params, *, batch_tile=2048):
    """Run the policy MLP as a batched-grid Pallas kernel.

    Args:
      x: (batch, state_size) float32 states.
      params: list of (W, b) with W: (in, out), b: (1, out) or (out,).
      batch_tile: rows per grid step (streams x/out; weights stay VMEM-resident).
    Returns:
      (batch, action_size) float32 actions in (-1, 1).
    """
    batch, state_size = x.shape
    action_size = params[-1][0].shape[1]

    padded_params = _pad_hidden_dims(params)

    # ---- batch tiling: overhanging last block, no batch padding ----
    tb = min(batch_tile, _round_up(batch, 8))
    tb = _round_up(tb, 8)                        # sublane-aligned block rows
    grid = (pl.cdiv(batch, tb),)

    x_f32 = x.astype(jnp.float32)

    # ---- specs: x/out stream per-tile (natural width), weights/biases resident ----
    flat_inputs = [x_f32]
    in_specs = [pl.BlockSpec((tb, state_size), lambda i: (i, 0))]
    for w_p, b_p in padded_params:
        flat_inputs.append(w_p)
        flat_inputs.append(b_p)
        in_specs.append(pl.BlockSpec(w_p.shape, lambda i: (0, 0)))  # resident
        in_specs.append(pl.BlockSpec(b_p.shape, lambda i: (0, 0)))  # resident
    out_spec = pl.BlockSpec((tb, action_size), lambda i: (i, 0))

    # ---- advisory cost estimate (matches what the kernel actually streams) ----
    flops = 2 * batch * sum(w.shape[0] * w.shape[1] for w, _ in params)
    bytes_accessed = 4 * (batch * (state_size + action_size)
                          + sum(int(w.size) + int(b.size)
                                for w, b in padded_params))
    cost = pl.CostEstimate(flops=flops,
                           transcendentals=batch * action_size,
                           bytes_accessed=bytes_accessed)

    return pl.pallas_call(
        _mlp_kernel,
        out_shape=jax.ShapeDtypeStruct((batch, action_size), jnp.float32),
        grid=grid,
        in_specs=in_specs,
        out_specs=out_spec,
        compiler_params=pltpu.CompilerParams(
            dimension_semantics=("parallel",)),
        cost_estimate=cost,
    )(*flat_inputs)


def init_params(key, state_size, action_size, hidden_sizes):
    """Deterministic init mimicking nn.Linear default: U(-1/sqrt(fan_in), +1/sqrt(fan_in))."""
    sizes = [state_size] + list(hidden_sizes) + [action_size]
    params = []
    for fan_in, fan_out in zip(sizes[:-1], sizes[1:]):
        key, kw, kb = jax.random.split(key, 3)
        bound = 1.0 / jnp.sqrt(jnp.float32(fan_in))
        w = jax.random.uniform(kw, (fan_in, fan_out), jnp.float32, -bound, bound)
        b = jax.random.uniform(kb, (1, fan_out), jnp.float32, -bound, bound)
        params.append((w, b))
    return params


def reference_forward(x, params):
    """Pure-JAX reference reproducing the PyTorch forward exactly."""
    h = x
    for w, b in params[:-1]:
        h = jax.nn.relu(h @ w + b)
    w, b = params[-1]
    return jnp.tanh(h @ w + b)


if __name__ == "__main__":
    state_size = 8
    action_size = 4
    hidden_sizes = [32, 32, 16]

    key = jax.random.PRNGKey(0)
    key, kx, kx2 = jax.random.split(key, 3)
    params = init_params(key, state_size, action_size, hidden_sizes)

    # Small-batch check (single grid step, tb clamped to 8).
    batch = 8
    x = jax.random.normal(kx, (batch, state_size), dtype=jnp.float32)
    out = jax.block_until_ready(fully_connected_policy(x, params))
    ref = reference_forward(x, params)
    assert out.shape == (batch, action_size)
    assert jnp.allclose(out, ref, atol=1e-5, rtol=1e-5), \
        "mismatch vs JAX reference (small batch)"

    # Multi-tile check with an overhanging last block
    # (300 rows, tb=128 -> grid of 3, last block 84 rows OOB and dropped on store).
    batch2 = 300
    x2 = jax.random.normal(kx2, (batch2, state_size), dtype=jnp.float32)
    out2 = jax.block_until_ready(fully_connected_policy(x2, params, batch_tile=128))
    ref2 = reference_forward(x2, params)
    assert out2.shape == (batch2, action_size)
    assert jnp.allclose(out2, ref2, atol=1e-5, rtol=1e-5), \
        "mismatch vs JAX reference (batched grid, overhanging block)"

    print("KERNEL_OK")
</pallas_src>

<mosaic_0001>
module attributes {stable_mosaic.version = 11 : i64} {
  func.func @_mlp_kernel(%arg0: i32, %arg1: memref<8x8xf32, #tpu.memory_space<vmem>>, %arg2: memref<8x128xf32, #tpu.memory_space<vmem>>, %arg3: memref<1x128xf32, #tpu.memory_space<vmem>>, %arg4: memref<128x128xf32, #tpu.memory_space<vmem>>, %arg5: memref<1x128xf32, #tpu.memory_space<vmem>>, %arg6: memref<128x128xf32, #tpu.memory_space<vmem>>, %arg7: memref<1x128xf32, #tpu.memory_space<vmem>>, %arg8: memref<128x4xf32, #tpu.memory_space<vmem>>, %arg9: memref<1x4xf32, #tpu.memory_space<vmem>>, %arg10: memref<8x4xf32, #tpu.memory_space<vmem>>) attributes {dimension_semantics = [#tpu.dimension_semantics<parallel>], iteration_bounds = array<i64: 1>, scalar_prefetch = 0 : i64, scratch_operands = 0 : i64, tpu.core_type = #tpu.core_type<tc>, window_params = [{transform_indices = @transform_0, window_bounds = array<i64: 8, 8>}, {pipeline_mode = #tpu.pipeline_mode<synchronous>, transform_indices = @transform_1, window_bounds = array<i64: 8, 128>}, {pipeline_mode = #tpu.pipeline_mode<synchronous>, transform_indices = @transform_2, window_bounds = array<i64: 1, 128>}, {pipeline_mode = #tpu.pipeline_mode<synchronous>, transform_indices = @transform_3, window_bounds = array<i64: 128, 128>}, {pipeline_mode = #tpu.pipeline_mode<synchronous>, transform_indices = @transform_4, window_bounds = array<i64: 1, 128>}, {pipeline_mode = #tpu.pipeline_mode<synchronous>, transform_indices = @transform_5, window_bounds = array<i64: 128, 128>}, {pipeline_mode = #tpu.pipeline_mode<synchronous>, transform_indices = @transform_6, window_bounds = array<i64: 1, 128>}, {pipeline_mode = #tpu.pipeline_mode<synchronous>, transform_indices = @transform_7, window_bounds = array<i64: 128, 4>}, {pipeline_mode = #tpu.pipeline_mode<synchronous>, transform_indices = @transform_8, window_bounds = array<i64: 1, 4>}, {transform_indices = @transform_9, window_bounds = array<i64: 8, 4>}]} {
    %c0 = arith.constant 0 : index
    %c0_0 = arith.constant 0 : index
    %0 = vector.load %arg1[%c0, %c0_0] : memref<8x8xf32, #tpu.memory_space<vmem>>, vector<8x8xf32>
    %c0_1 = arith.constant 0 : index
    %c0_2 = arith.constant 0 : index
    %1 = vector.load %arg2[%c0_1, %c0_2] : memref<8x128xf32, #tpu.memory_space<vmem>>, vector<8x128xf32>
    %c0_3 = arith.constant 0 : index
    %c0_4 = arith.constant 0 : index
    %2 = vector.load %arg3[%c0_3, %c0_4] : memref<1x128xf32, #tpu.memory_space<vmem>>, vector<1x128xf32>
    %cst = arith.constant dense<0.000000e+00> : vector<8x128xf32>
    %3 = tpu.matmul %0, %1, %cst {dimension_numbers = #tpu.dot_dimension_numbers<[1], [0], [0], [1], [0, 0, 1, 1], [], []>} : vector<8x8xf32>, vector<8x128xf32>, vector<8x128xf32> -> vector<8x128xf32>
    %4 = vector.broadcast %2 : vector<1x128xf32> to vector<8x128xf32>
    %5 = arith.addf %3, %4 : vector<8x128xf32>
    %cst_5 = arith.constant 0.000000e+00 : f32
    %6 = vector.broadcast %cst_5 : f32 to vector<8x128xf32>
    %7 = arith.maximumf %5, %6 : vector<8x128xf32>
    %c0_6 = arith.constant 0 : index
    %c0_7 = arith.constant 0 : index
    %8 = vector.load %arg4[%c0_6, %c0_7] : memref<128x128xf32, #tpu.memory_space<vmem>>, vector<128x128xf32>
    %c0_8 = arith.constant 0 : index
    %c0_9 = arith.constant 0 : index
    %9 = vector.load %arg5[%c0_8, %c0_9] : memref<1x128xf32, #tpu.memory_space<vmem>>, vector<1x128xf32>
    %cst_10 = arith.constant dense<0.000000e+00> : vector<8x128xf32>
    %10 = tpu.matmul %7, %8, %cst_10 {dimension_numbers = #tpu.dot_dimension_numbers<[1], [0], [0], [1], [0, 0, 1, 1], [], []>} : vector<8x128xf32>, vector<128x128xf32>, vector<8x128xf32> -> vector<8x128xf32>
    %11 = vector.broadcast %9 : vector<1x128xf32> to vector<8x128xf32>
    %12 = arith.addf %10, %11 : vector<8x128xf32>
    %cst_11 = arith.constant 0.000000e+00 : f32
    %13 = vector.broadcast %cst_11 : f32 to vector<8x128xf32>
    %14 = arith.maximumf %12, %13 : vector<8x128xf32>
    %c0_12 = arith.constant 0 : index
    %c0_13 = arith.constant 0 : index
    %15 = vector.load %arg6[%c0_12, %c0_13] : memref<128x128xf32, #tpu.memory_space<vmem>>, vector<128x128xf32>
    %c0_14 = arith.constant 0 : index
    %c0_15 = arith.constant 0 : index
    %16 = vector.load %arg7[%c0_14, %c0_15] : memref<1x128xf32, #tpu.memory_space<vmem>>, vector<1x128xf32>
    %cst_16 = arith.constant dense<0.000000e+00> : vector<8x128xf32>
    %17 = tpu.matmul %14, %15, %cst_16 {dimension_numbers = #tpu.dot_dimension_numbers<[1], [0], [0], [1], [0, 0, 1, 1], [], []>} : vector<8x128xf32>, vector<128x128xf32>, vector<8x128xf32> -> vector<8x128xf32>
    %18 = vector.broadcast %16 : vector<1x128xf32> to vector<8x128xf32>
    %19 = arith.addf %17, %18 : vector<8x128xf32>
    %cst_17 = arith.constant 0.000000e+00 : f32
    %20 = vector.broadcast %cst_17 : f32 to vector<8x128xf32>
    %21 = arith.maximumf %19, %20 : vector<8x128xf32>
    %c0_18 = arith.constant 0 : index
    %c0_19 = arith.constant 0 : index
    %22 = vector.load %arg8[%c0_18, %c0_19] : memref<128x4xf32, #tpu.memory_space<vmem>>, vector<128x4xf32>
    %c0_20 = arith.constant 0 : index
    %c0_21 = arith.constant 0 : index
    %23 = vector.load %arg9[%c0_20, %c0_21] : memref<1x4xf32, #tpu.memory_space<vmem>>, vector<1x4xf32>
    %cst_22 = arith.constant dense<0.000000e+00> : vector<8x4xf32>
    %24 = tpu.matmul %21, %22, %cst_22 {dimension_numbers = #tpu.dot_dimension_numbers<[1], [0], [0], [1], [0, 0, 1, 1], [], []>} : vector<8x128xf32>, vector<128x4xf32>, vector<8x4xf32> -> vector<8x4xf32>
    %25 = vector.broadcast %23 : vector<1x4xf32> to vector<8x4xf32>
    %26 = arith.addf %24, %25 : vector<8x4xf32>
    %27 = math.tanh %26 : vector<8x4xf32>
    %c0_23 = arith.constant 0 : index
    %c0_24 = arith.constant 0 : index
    %28 = vector.load %arg10[%c0_23, %c0_24] : memref<8x4xf32, #tpu.memory_space<vmem>>, vector<8x4xf32>
    tpu.vector_store %arg10[%c0_23, %c0_24], %27 {strides = array<i32>} : memref<8x4xf32, #tpu.memory_space<vmem>>, vector<8x4xf32>,
    return
  }
  func.func @transform_0(%arg0: i32) -> (i32, i32) {
    %c0_i32 = arith.constant 0 : i32
    %c0_i32_0 = arith.constant 0 : i32
    return %arg0, %c0_i32 : i32, i32
  }
  func.func @transform_1(%arg0: i32) -> (i32, i32) {
    %c0_i32 = arith.constant 0 : i32
    %c0_i32_0 = arith.constant 0 : i32
    %c0_i32_1 = arith.constant 0 : i32
    return %c0_i32, %c0_i32_0 : i32, i32
  }
  func.func @transform_2(%arg0: i32) -> (i32, i32) {
    %c0_i32 = arith.constant 0 : i32
    %c0_i32_0 = arith.constant 0 : i32
    %c0_i32_1 = arith.constant 0 : i32
    return %c0_i32, %c0_i32_0 : i32, i32
  }
  func.func @transform_3(%arg0: i32) -> (i32, i32) {
    %c0_i32 = arith.constant 0 : i32
    %c0_i32_0 = arith.constant 0 : i32
    %c0_i32_1 = arith.constant 0 : i32
    return %c0_i32, %c0_i32_0 : i32, i32
  }
  func.func @transform_4(%arg0: i32) -> (i32, i32) {
    %c0_i32 = arith.constant 0 : i32
    %c0_i32_0 = arith.constant 0 : i32
    %c0_i32_1 = arith.constant 0 : i32
    return %c0_i32, %c0_i32_0 : i32, i32
  }
  func.func @transform_5(%arg0: i32) -> (i32, i32) {
    %c0_i32 = arith.constant 0 : i32
    %c0_i32_0 = arith.constant 0 : i32
    %c0_i32_1 = arith.constant 0 : i32
    return %c0_i32, %c0_i32_0 : i32, i32
  }
  func.func @transform_6(%arg0: i32) -> (i32, i32) {
    %c0_i32 = arith.constant 0 : i32
    %c0_i32_0 = arith.constant 0 : i32
    %c0_i32_1 = arith.constant 0 : i32
    return %c0_i32, %c0_i32_0 : i32, i32
  }
  func.func @transform_7(%arg0: i32) -> (i32, i32) {
    %c0_i32 = arith.constant 0 : i32
    %c0_i32_0 = arith.constant 0 : i32
    %c0_i32_1 = arith.constant 0 : i32
    return %c0_i32, %c0_i32_0 : i32, i32
  }
  func.func @transform_8(%arg0: i32) -> (i32, i32) {
    %c0_i32 = arith.constant 0 : i32
    %c0_i32_0 = arith.constant 0 : i32
    %c0_i32_1 = arith.constant 0 : i32
    return %c0_i32, %c0_i32_0 : i32, i32
  }
  func.func @transform_9(%arg0: i32) -> (i32, i32) {
    %c0_i32 = arith.constant 0 : i32
    %c0_i32_0 = arith.constant 0 : i32
    return %arg0, %c0_i32 : i32, i32
  }
}

</mosaic_0001>

<llo_original>
// kernel: tpu_custom_call.1
$region0: #{tpu_custom_call.1}
  #allocation0 [shape = 'u32[]', space=smem, size = 0x4, offset = 0x4, fixed_abs, tag = 'smem constant byte address 0x4 - core index']
  #allocation1 [shape = 'u32[72,128]{1,0:T(1,128)}', space=vmem, size = 0x9000, scoped, tag = 'internal scratch']
  %s0 = inlined_call_operand.hbm [shape: f32[8,8], index: 0, kind: input, shape index: {}]
  %s1 = inlined_call_operand.hbm [shape: f32[8,128], index: 1, kind: input, shape index: {}]
  %s2 = inlined_call_operand.vmem [shape: f32[1,128], index: 2, kind: input, shape index: {}]
  %s3 = inlined_call_operand.vmem [shape: f32[128,128], index: 3, kind: input, shape index: {}]
  %s4 = inlined_call_operand.vmem [shape: f32[1,128], index: 4, kind: input, shape index: {}]
  %s5 = inlined_call_operand.hbm [shape: f32[128,128], index: 5, kind: input, shape index: {}]
  %s6 = inlined_call_operand.vmem [shape: f32[1,128], index: 6, kind: input, shape index: {}]
  %s7 = inlined_call_operand.vmem [shape: f32[128,4], index: 7, kind: input, shape index: {}]
  %s8 = inlined_call_operand.vmem [shape: f32[1,4], index: 8, kind: input, shape index: {}]
  %s9 = inlined_call_operand.vmem [shape: f32[8,4], index: 9, kind: output, shape index: {}]
  %s10 = sld [smem:[#allocation0]]
  $region58: #{tpu_custom_call.1} parent=0
    _
  %s12 = ssub.s32 1, %s10
  %s13 = scalar_select 0, %s12, %s10
  $region1: #{tpu_custom_call.1} parent=0
    #allocation2 [shape = 'u8[4096]{0}', space=vmem, size = 0x1000, scoped, tag = 'input window, operand 0, single buffered']
    #allocation3 [shape = 's32[1]{0}', space=sflag, size = 0x4, scoped, tag = 'scoped memory for tpu_custom_call.1']
    #allocation4 [shape = 'u8[4096]{0}', space=vmem, size = 0x1000, scoped, tag = 'input window, operand 1, single buffered']
    #allocation5 [shape = 's32[1]{0}', space=sflag, size = 0x4, scoped, tag = 'scoped memory for tpu_custom_call.1']
    #allocation6 [shape = 'u8[65536]{0}', space=vmem, size = 0x10000, scoped, tag = 'input window, operand 5, single buffered']
    %14 = vsyncpa [#allocation3], 0
    %15 = vsyncpa [#allocation5], 0
    // Predicated region
    $region2: #{tpu_custom_call.1} parent=1 // pred_check
      _
    $region3: #{tpu_custom_call.1} parent=1 // pred_check_branch
      %17 = sbr.rel (0) target = $region5
    $region4: #{tpu_custom_call.1} parent=1 // pred_region
      %19 = vsyncadd [#allocation3], 0
      %s21 = sshll.u32 %s0, 4
      %s22 = int_to_ptr.hbm [resolvable:$true] %s21
      %s23 = sshll.u32 [#allocation2], 4
      %s24 = int_to_ptr.vmem [resolvable:$true] %s23
      %26 = dma.hbm_to_vmem [thread:$0]  %s22, 128, %s24, [#allocation3]
    $region5: #{tpu_custom_call.1} parent=1 // pred_fallthru
      _
    // Predicated region
    $region6: #{tpu_custom_call.1} parent=1 // pred_check
      _
    $region7: #{tpu_custom_call.1} parent=1 // pred_check_branch
      %28 = sbr.rel (0) target = $region9
    $region8: #{tpu_custom_call.1} parent=1 // pred_region
      %30 = vsyncadd [#allocation5], 0
      %s32 = sshll.u32 %s1, 4
      %s33 = int_to_ptr.hbm [resolvable:$true] %s32
      %s34 = sshll.u32 [#allocation4], 4
      %s35 = int_to_ptr.vmem [resolvable:$true] %s34
      %37 = dma.hbm_to_vmem [thread:$0]  %s33, 128, %s35, [#allocation5]
    $region9: #{tpu_custom_call.1} parent=1 // pred_fallthru
      _
    // Predicated region
    $region10: #{tpu_custom_call.1} parent=1 // pred_check
      _
    $region11: #{tpu_custom_call.1} parent=1 // pred_check_branch
      %39 = sbr.rel (0) target = $region13
    $region12: #{tpu_custom_call.1} parent=1 // pred_region
      _
    $region13: #{tpu_custom_call.1} parent=1 // pred_fallthru
      _
    // Predicated region
    $region14: #{tpu_custom_call.1} parent=1 // pred_check
      _
    $region15: #{tpu_custom_call.1} parent=1 // pred_check_branch
      %41 = sbr.rel (0) target = $region17
    $region16: #{tpu_custom_call.1} parent=1 // pred_region
      _
    $region17: #{tpu_custom_call.1} parent=1 // pred_fallthru
      _
    // Predicated region
    $region18: #{tpu_custom_call.1} parent=1 // pred_check
      _
    $region19: #{tpu_custom_call.1} parent=1 // pred_check_branch
      %43 = sbr.rel (0) target = $region21
    $region20: #{tpu_custom_call.1} parent=1 // pred_region
      _
    $region21: #{tpu_custom_call.1} parent=1 // pred_fallthru
      _
    // Predicated region
    $region22: #{tpu_custom_call.1} parent=1 // pred_check
      _
    $region23: #{tpu_custom_call.1} parent=1 // pred_check_branch
      %45 = sbr.rel (0) target = $region25
    $region24: #{tpu_custom_call.1} parent=1 // pred_region
      %47 = vsyncadd [#allocation5], 0
      %s48 = sshll.u32 %s5, 4
      %s49 = int_to_ptr.hbm [resolvable:$true] %s48
      %s50 = sshll.u32 [#allocation6], 4
      %s51 = int_to_ptr.vmem [resolvable:$true] %s50
      %56 = dma.hbm_to_vmem [thread:$0]  %s49, 2048, %s51, [#allocation5], 128, 128, 8
    $region25: #{tpu_custom_call.1} parent=1 // pred_fallthru
      _
    // Predicated region
    $region26: #{tpu_custom_call.1} parent=1 // pred_check
      _
    $region27: #{tpu_custom_call.1} parent=1 // pred_check_branch
      %58 = sbr.rel (0) target = $region29
    $region28: #{tpu_custom_call.1} parent=1 // pred_region
      _
    $region29: #{tpu_custom_call.1} parent=1 // pred_fallthru
      _
    // Predicated region
    $region30: #{tpu_custom_call.1} parent=1 // pred_check
      _
    $region31: #{tpu_custom_call.1} parent=1 // pred_check_branch
      %60 = sbr.rel (0) target = $region33
    $region32: #{tpu_custom_call.1} parent=1 // pred_region
      _
    $region33: #{tpu_custom_call.1} parent=1 // pred_fallthru
      _
    // Predicated region
    $region34: #{tpu_custom_call.1} parent=1 // pred_check
      _
    $region35: #{tpu_custom_call.1} parent=1 // pred_check_branch
      %62 = sbr.rel (0) target = $region37
    $region36: #{tpu_custom_call.1} parent=1 // pred_region
      _
    $region37: #{tpu_custom_call.1} parent=1 // pred_fallthru
      _
    // Predicated region
    $region38: #{tpu_custom_call.1} parent=1 // pred_check
      _
    $region39: #{tpu_custom_call.1} parent=1 // pred_check_branch
      %64 = sbr.rel (0) target = $region41
    $region40: #{tpu_custom_call.1} parent=1 // pred_region
      %66 = dma.done [#allocation3], 128
    $region41: #{tpu_custom_call.1} parent=1 // pred_fallthru
      _
    // Predicated region
    $region42: #{tpu_custom_call.1} parent=1 // pred_check
      _
    $region43: #{tpu_custom_call.1} parent=1 // pred_check_branch
      %68 = sbr.rel (0) target = $region45
    $region44: #{tpu_custom_call.1} parent=1 // pred_region
      %70 = dma.done [#allocation5], 128
    $region45: #{tpu_custom_call.1} parent=1 // pred_fallthru
      _
    // Predicated region
    $region46: #{tpu_custom_call.1} parent=1 // pred_check
      _
    $region47: #{tpu_custom_call.1} parent=1 // pred_check_branch
      %72 = sbr.rel (0) target = $region49
    $region48: #{tpu_custom_call.1} parent=1 // pred_region
      %74 = dma.done [#allocation5], 2048
    $region49: #{tpu_custom_call.1} parent=1 // pred_fallthru
      _
    %v75 = vld [vmem:[#allocation2] sm:$0xff]
    %v76 = vld [vmem:[#allocation4] sm:$0xff]
    %v77 = vld [vmem:[%s2] sm:$0x1]
    %v79 = vperm.slane %v77, 0
    %vm81 = vcmask 64512
    %v83 = vsel %vm81, %v75, 0
    %85 = vmatpush.msra.mxu0 0.0
    %86 = vmatpush.msra.mxu0 0.0
    %87 = vmatpush.msra.mxu0 0.0
    %88 = vmatpush.msra.mxu0 0.0
    %89 = vmatpush.msra.mxu0 0.0
    %90 = vmatpush.msra.mxu0 0.0
    %91 = vmatpush.msra.mxu0 0.0
    %92 = vmatpush.msra.mxu0 0.0
    %93 = vmatpush.msra.mxu0 0.0
    %94 = vmatpush.msra.mxu0 0.0
    %95 = vmatpush.msra.mxu0 0.0
    %96 = vmatpush.msra.mxu0 0.0
    %97 = vmatpush.msra.mxu0 0.0
    %98 = vmatpush.msra.mxu0 0.0
    %99 = vmatpush.msra.mxu0 0.0
    %100 = vmatpush.msra.mxu0 %v76
    %101 = vmatmul.f32.gmra.mxu0 %v83
    %v102 = vpop.f32.mrf.mxu0
    %v103 = vadd.f32 %v79, %v102
    %104 = vdwg.mxu0
    %v105 = vmax.f32 %v103, 0.0
    %v106 = vld [vmem:[%s3] sm:$0xff]
    %v107 = vld [vmem:[%s3 + $0x8] sm:$0xff]
    %v108 = vld [vmem:[%s3 + $0x10] sm:$0xff]
    %v109 = vld [vmem:[%s3 + $0x18] sm:$0xff]
    %v110 = vld [vmem:[%s3 + $0x20] sm:$0xff]
    %v111 = vld [vmem:[%s3 + $0x28] sm:$0xff]
    %v112 = vld [vmem:[%s3 + $0x30] sm:$0xff]
    %v113 = vld [vmem:[%s3 + $0x38] sm:$0xff]
    %v114 = vld [vmem:[%s3 + $0x40] sm:$0xff]
    %v115 = vld [vmem:[%s3 + $0x48] sm:$0xff]
    %v116 = vld [vmem:[%s3 + $0x50] sm:$0xff]
    %v117 = vld [vmem:[%s3 + $0x58] sm:$0xff]
    %v118 = vld [vmem:[%s3 + $0x60] sm:$0xff]
    %v119 = vld [vmem:[%s3 + $0x68] sm:$0xff]
    %v120 = vld [vmem:[%s3 + $0x70] sm:$0xff]
    %v121 = vld [vmem:[%s3 + $0x78] sm:$0xff]
    %v122 = vld [vmem:[%s4] sm:$0x1]
    %v124 = vperm.slane %v122, 0
    %126 = vmatpush.msra.mxu0 %v121
    %127 = vmatpush.msra.mxu0 %v120
    %128 = vmatpush.msra.mxu0 %v119
    %129 = vmatpush.msra.mxu0 %v118
    %130 = vmatpush.msra.mxu0 %v117
    %131 = vmatpush.msra.mxu0 %v116
    %132 = vmatpush.msra.mxu0 %v115
    %133 = vmatpush.msra.mxu0 %v114
    %134 = vmatpush.msra.mxu0 %v113
    %135 = vmatpush.msra.mxu0 %v112
    %136 = vmatpush.msra.mxu0 %v111
    %137 = vmatpush.msra.mxu0 %v110
    %138 = vmatpush.msra.mxu0 %v109
    %139 = vmatpush.msra.mxu0 %v108
    %140 = vmatpush.msra.mxu0 %v107
    %141 = vmatpush.msra.mxu0 %v106
    %142 = vmatmul.f32.gmra.mxu0 %v105
    %v143 = vpop.f32.mrf.mxu0
    %v144 = vadd.f32 %v124, %v143
    %145 = vdwg.mxu0
    %v146 = vmax.f32 %v144, 0.0
    %v147 = vld [vmem:[#allocation6] sm:$0xff]
    %v148 = vld [vmem:[#allocation6 + $0x8] sm:$0xff]
    %v149 = vld [vmem:[#allocation6 + $0x10] sm:$0xff]
    %v150 = vld [vmem:[#allocation6 + $0x18] sm:$0xff]
    %v151 = vld [vmem:[#allocation6 + $0x20] sm:$0xff]
    %v152 = vld [vmem:[#allocation6 + $0x28] sm:$0xff]
    %v153 = vld [vmem:[#allocation6 + $0x30] sm:$0xff]
    %v154 = vld [vmem:[#allocation6 + $0x38] sm:$0xff]
    %v155 = vld [vmem:[#allocation6 + $0x40] sm:$0xff]
    %v156 = vld [vmem:[#allocation6 + $0x48] sm:$0xff]
    %v157 = vld [vmem:[#allocation6 + $0x50] sm:$0xff]
    %v158 = vld [vmem:[#allocation6 + $0x58] sm:$0xff]
    %v159 = vld [vmem:[#allocation6 + $0x60] sm:$0xff]
    %v160 = vld [vmem:[#allocation6 + $0x68] sm:$0xff]
    %v161 = vld [vmem:[#allocation6 + $0x70] sm:$0xff]
    %v162 = vld [vmem:[#allocation6 + $0x78] sm:$0xff]
    %v163 = vld [vmem:[%s6] sm:$0x1]
    %v165 = vperm.slane %v163, 0
    %167 = vmatpush.msra.mxu0 %v162
    %168 = vmatpush.msra.mxu0 %v161
    %169 = vmatpush.msra.mxu0 %v160
    %170 = vmatpush.msra.mxu0 %v159
    %171 = vmatpush.msra.mxu0 %v158
    %172 = vmatpush.msra.mxu0 %v157
    %173 = vmatpush.msra.mxu0 %v156
    %174 = vmatpush.msra.mxu0 %v155
    %175 = vmatpush.msra.mxu0 %v154
    %176 = vmatpush.msra.mxu0 %v153
    %177 = vmatpush.msra.mxu0 %v152
    %178 = vmatpush.msra.mxu0 %v151
    %179 = vmatpush.msra.mxu0 %v150
    %180 = vmatpush.msra.mxu0 %v149
    %181 = vmatpush.msra.mxu0 %v148
    %182 = vmatpush.msra.mxu0 %v147
    %183 = vmatmul.f32.gmra.mxu0 %v146
    %v184 = vpop.f32.mrf.mxu0
    %v185 = vadd.f32 %v165, %v184
    %186 = vdwg.mxu0
    %v187 = vmax.f32 %v185, 0.0
    %v188 = vld [vmem:[%s7] sm:$0xff]
    %v189 = vld [vmem:[%s7 + $0x8] sm:$0xff]
    %v190 = vld [vmem:[%s7 + $0x10] sm:$0xff]
    %v191 = vld [vmem:[%s7 + $0x18] sm:$0xff]
    %v192 = vld [vmem:[%s7 + $0x20] sm:$0xff]
    %v193 = vld [vmem:[%s7 + $0x28] sm:$0xff]
    %v194 = vld [vmem:[%s7 + $0x30] sm:$0xff]
    %v195 = vld [vmem:[%s7 + $0x38] sm:$0xff]
    %v196 = vld [vmem:[%s7 + $0x40] sm:$0xff]
    %v197 = vld [vmem:[%s7 + $0x48] sm:$0xff]
    %v198 = vld [vmem:[%s7 + $0x50] sm:$0xff]
    %v199 = vld [vmem:[%s7 + $0x58] sm:$0xff]
    %v200 = vld [vmem:[%s7 + $0x60] sm:$0xff]
    %v201 = vld [vmem:[%s7 + $0x68] sm:$0xff]
    %v202 = vld [vmem:[%s7 + $0x70] sm:$0xff]
    %v203 = vld [vmem:[%s7 + $0x78] sm:$0xff]
    %v204 = vld [vmem:[%s8] sm:$0x1]
    %v206 = vperm.slane %v204, 0
    %208 = vmatpush.msra.mxu0 %v203
    %209 = vmatpush.msra.mxu0 %v202
    %210 = vmatpush.msra.mxu0 %v201
    %211 = vmatpush.msra.mxu0 %v200
    %212 = vmatpush.msra.mxu0 %v199
    %213 = vmatpush.msra.mxu0 %v198
    %214 = vmatpush.msra.mxu0 %v197
    %215 = vmatpush.msra.mxu0 %v196
    %216 = vmatpush.msra.mxu0 %v195
    %217 = vmatpush.msra.mxu0 %v194
    %218 = vmatpush.msra.mxu0 %v193
    %219 = vmatpush.msra.mxu0 %v192
    %220 = vmatpush.msra.mxu0 %v191
    %221 = vmatpush.msra.mxu0 %v190
    %222 = vmatpush.msra.mxu0 %v189
    %223 = vmatpush.msra.mxu0 %v188
    %224 = vmatmul.f32.gmra.mxu0 %v187
    %v225 = vpop.f32.mrf.mxu0
    %v226 = vadd.f32 %v206, %v225
    %227 = vdwg.mxu0
    %v228 = vtanh.pop %v226
    %vm229 = vcmask 31744
    %230 = vst.msk [vmem:[%s9] sm:$0xff] %vm229, %v228
    // Predicated region
    $region50: #{tpu_custom_call.1} parent=1 // pred_check
      _
    $region51: #{tpu_custom_call.1} parent=1 // pred_check_branch
      %232 = sbr.rel (0) target = $region53
    $region52: #{tpu_custom_call.1} parent=1 // pred_region
      _
    $region53: #{tpu_custom_call.1} parent=1 // pred_fallthru
      _
    // Predicated region
    $region54: #{tpu_custom_call.1} parent=1 // pred_check
      _
    $region55: #{tpu_custom_call.1} parent=1 // pred_check_branch
      %234 = sbr.rel (0) target = $region57
    $region56: #{tpu_custom_call.1} parent=1 // pred_region
      _
    $region57: #{tpu_custom_call.1} parent=1 // pred_fallthru
      _
    %235 = vsyncpa [#allocation3], 1
    %236 = vsyncpa [#allocation5], 1

</llo_original>
